<compile_context>
chip_gen: v6e
topology: v6e:2x2x1
jax: 0.10.0
libtpu: 0.0.40
codegen_flags: <defaults>
</compile_context>

<pallas_src>
import jax
import jax.numpy as jnp
from jax.experimental import pallas as pl
from jax.experimental.pallas import tpu as pltpu

_HIDDEN = 128  # nn.Linear(in_channel, 128)


def _round_up(n, m):
    return ((n + m - 1) // m) * m


def mlp_silu_kernel(x_ref, w1_ref, b1_ref, w2_ref, b2_ref, o_ref):
    # In-kernel cast: x arrives in its HBM dtype (f32); the bf16 cast happens in
    # VMEM and hides under the MXU/DMA instead of costing extra HBM traffic.
    x = x_ref[...].astype(w1_ref.dtype)
    # First linear: bf16 (tb, Cin_p) @ (Cin_p, 128) on the MXU, f32 accumulate.
    h = jnp.dot(x, w1_ref[...], preferred_element_type=jnp.float32)
    h = h + b1_ref[...]
    # SiLU = h * sigmoid(h).  Clamp the exp argument so exp(-h) never overflows
    # to +inf for very negative h (sigmoid underflows to ~0 there anyway); exp
    # and the approx reciprocal both stay on the EUP slot, off the VALU.
    z = jnp.exp(-jnp.maximum(h, -30.0))
    h = h * pl.reciprocal(1.0 + z, approx=True)
    # Second linear: bf16 (tb, 128) @ (128, Cout_p), f32 accumulate, lane-dense store.
    y = jnp.dot(h.astype(w2_ref.dtype), w2_ref[...],
                preferred_element_type=jnp.float32)
    o_ref[...] = (y + b2_ref[...]).astype(o_ref.dtype)


def mlp_silu(x, w1, b1, w2, b2, *, tile_b=512, compute_dtype=jnp.bfloat16,
             out_dtype=None):
    """Fused MLP forward.

    x : (B, Cin) activations.
    w1: (Cin, 128), b1: (128,)   -- first Linear (transposed vs. PyTorch storage).
    w2: (128, Cout), b2: (Cout,) -- second Linear (transposed vs. PyTorch storage).
    out_dtype: defaults to x.dtype; pass jnp.bfloat16 to halve output writeback.
    """
    B, Cin = x.shape
    Cin_w, H = w1.shape
    H2, Cout = w2.shape
    assert Cin_w == Cin and H2 == H == _HIDDEN
    out_dtype = x.dtype if out_dtype is None else out_dtype

    # ---- lane-dense padding ---------------------------------------------------
    # Contraction dim: zero-pad Cin to a multiple of 128 (numerically exact).
    Cin_p = _round_up(max(Cin, 128), 128)
    if Cin_p != Cin:
        x = jnp.pad(x, ((0, 0), (0, Cin_p - Cin)))
        w1 = jnp.pad(w1, ((0, Cin_p - Cin), (0, 0)))
    # Output dim: >=128 for unmasked stores; multiples of 256 beyond that so the
    # 256-wide v6e/v7x MXU is filled on the second matmul (zero columns).
    Cout_p = 128 if Cout <= 128 else _round_up(Cout, 256)
    if Cout_p != Cout:
        w2 = jnp.pad(w2, ((0, 0), (0, Cout_p - Cout)))
        b2 = jnp.pad(b2, (0, Cout_p - Cout))

    x_itemsize = jnp.dtype(x.dtype).itemsize
    c_itemsize = jnp.dtype(compute_dtype).itemsize
    o_itemsize = jnp.dtype(out_dtype).itemsize

    # ---- batch tile selection against an explicit VMEM budget ------------------
    # Resident VMEM: double-buffered x / out blocks, weight blocks (double-
    # buffered by the pipeliner even though their block index is constant),
    # biases and the f32 intermediates.
    def vmem_bytes(tb_):
        return (2 * tb_ * Cin_p * x_itemsize
                + 2 * tb_ * Cout_p * o_itemsize
                + 2 * (Cin_p * H + H * Cout_p) * c_itemsize
                + 2 * (H + Cout_p) * 4
                + tb_ * (H + Cout_p) * 4)

    # Keep >=2 batch tiles whenever B allows so the "parallel" axis can shard
    # across v7x's two TensorCores (only a little per-step overhead on v5e/v6e).
    tb = min(tile_b, _round_up(pl.cdiv(max(B, 1), 2), 8))
    tb = max(8, _round_up(tb, 8))
    # 40 MiB budget fits v7x's 64 MiB physical VMEM with headroom and is a small
    # fraction of v5e/v6e's 128 MiB; vmem_limit_bytes below raises the 16/32 MiB
    # default scoped limits accordingly.
    vmem_budget = 40 * 1024 * 1024
    while vmem_bytes(tb) > vmem_budget and tb > 8:
        tb = max(8, _round_up(tb // 2, 8))

    B_p = _round_up(B, tb)
    if B_p != B:
        x = jnp.pad(x, ((0, B_p - B), (0, 0)))
    grid_b = B_p // tb  # pipelined x/out DMAs + megacore sharding for real batches

    vmem_limit = int(min(64 * 1024 * 1024,
                         max(32 * 1024 * 1024, vmem_bytes(tb) * 5 // 4)))

    # Weights/biases are DMA'd once (constant block index), so pre-casting them
    # in the wrapper is cheap; x deliberately stays uncast (cast is in-kernel).
    w1_c = w1.astype(compute_dtype)
    w2_c = w2.astype(compute_dtype)
    b1_2d = b1.astype(jnp.float32).reshape(1, H)
    b2_2d = b2.astype(jnp.float32).reshape(1, Cout_p)

    cost = pl.CostEstimate(
        flops=2 * B_p * (Cin_p * H + H * Cout_p),
        transcendentals=B_p * H,
        bytes_accessed=(B_p * Cin_p * x_itemsize            # x (read once, f32)
                        + (Cin_p * H + H * Cout_p) * c_itemsize  # weights (bf16)
                        + (H + Cout_p) * 4                   # biases
                        + B_p * Cout_p * o_itemsize))        # out

    # TODO(synk): for very large Cin add a K grid axis ("arbitrary") with an f32
    # VMEM accumulator, and for very large Cout an N grid axis ("parallel")
    # tiling w2/b2/out, instead of loading full weight blocks at once.
    # TODO(synk): pipeline_mode=pl.Buffered(1) on the constant-index weight/bias
    # specs would halve their resident VMEM; kept on default buffering here.
    out_p = pl.pallas_call(
        mlp_silu_kernel,
        out_shape=jax.ShapeDtypeStruct((B_p, Cout_p), out_dtype),
        grid_spec=pltpu.PrefetchScalarGridSpec(
            num_scalar_prefetch=0,
            grid=(grid_b,),
            in_specs=[
                pl.BlockSpec((tb, Cin_p), lambda i: (i, 0)),
                # Constant block index -> weights/biases fetched once, kept resident.
                pl.BlockSpec((Cin_p, H), lambda i: (0, 0)),
                pl.BlockSpec((1, H), lambda i: (0, 0)),
                pl.BlockSpec((H, Cout_p), lambda i: (0, 0)),
                pl.BlockSpec((1, Cout_p), lambda i: (0, 0)),
            ],
            out_specs=pl.BlockSpec((tb, Cout_p), lambda i: (i, 0)),
        ),
        compiler_params=pltpu.CompilerParams(
            dimension_semantics=("parallel",),
            vmem_limit_bytes=vmem_limit),
        cost_estimate=cost,
    )(x, w1_c, b1_2d, w2_c, b2_2d)

    # Strip batch padding and zero output-lane padding.
    return out_p[:B, :Cout]


def init_params(key, in_channel, out_channel, hidden=_HIDDEN, dtype=jnp.float32):
    # Deterministic synthetic init (uniform, PyTorch-Linear-like bounds).
    k1, k2, k3, k4 = jax.random.split(key, 4)
    bound1 = 1.0 / (in_channel ** 0.5)
    bound2 = 1.0 / (hidden ** 0.5)
    w1 = jax.random.uniform(k1, (in_channel, hidden), dtype, -bound1, bound1)
    b1 = jax.random.uniform(k2, (hidden,), dtype, -bound1, bound1)
    w2 = jax.random.uniform(k3, (hidden, out_channel), dtype, -bound2, bound2)
    b2 = jax.random.uniform(k4, (out_channel,), dtype, -bound2, bound2)
    return w1, b1, w2, b2


if __name__ == "__main__":
    key = jax.random.PRNGKey(0)
    kx, kp = jax.random.split(key)

    B, in_channel, out_channel = 8, 32, 4
    x = jax.random.normal(kx, (B, in_channel), jnp.float32)
    w1, b1, w2, b2 = init_params(kp, in_channel, out_channel)

    out = jax.block_until_ready(mlp_silu(x, w1, b1, w2, b2))

    # Pure-JAX fp32 reference (same math as the PyTorch module).
    h_ref = x @ w1 + b1
    h_ref = h_ref * jax.nn.sigmoid(h_ref)
    ref = h_ref @ w2 + b2
    assert out.shape == (B, out_channel)
    # bf16 matmul inputs + approx reciprocal -> relaxed tolerance vs fp32 reference.
    assert jnp.allclose(out, ref, atol=2e-2, rtol=2e-2)

    print("KERNEL_OK")
</pallas_src>

<mosaic_0001>
module attributes {stable_mosaic.version = 11 : i64} {
  func.func @mlp_silu_kernel(%arg0: i32, %arg1: memref<8x128xf32, #tpu.memory_space<vmem>>, %arg2: memref<128x128xbf16, #tpu.memory_space<vmem>>, %arg3: memref<1x128xf32, #tpu.memory_space<vmem>>, %arg4: memref<128x128xbf16, #tpu.memory_space<vmem>>, %arg5: memref<1x128xf32, #tpu.memory_space<vmem>>, %arg6: memref<8x128xf32, #tpu.memory_space<vmem>>) attributes {dimension_semantics = [#tpu.dimension_semantics<parallel>], iteration_bounds = array<i64: 1>, scalar_prefetch = 0 : i64, scratch_operands = 0 : i64, tpu.core_type = #tpu.core_type<tc>, window_params = [{transform_indices = @transform_0, window_bounds = array<i64: 8, 128>}, {pipeline_mode = #tpu.pipeline_mode<synchronous>, transform_indices = @transform_1, window_bounds = array<i64: 128, 128>}, {pipeline_mode = #tpu.pipeline_mode<synchronous>, transform_indices = @transform_2, window_bounds = array<i64: 1, 128>}, {pipeline_mode = #tpu.pipeline_mode<synchronous>, transform_indices = @transform_3, window_bounds = array<i64: 128, 128>}, {pipeline_mode = #tpu.pipeline_mode<synchronous>, transform_indices = @transform_4, window_bounds = array<i64: 1, 128>}, {transform_indices = @transform_5, window_bounds = array<i64: 8, 128>}]} {
    %c0 = arith.constant 0 : index
    %c0_0 = arith.constant 0 : index
    %0 = vector.load %arg1[%c0, %c0_0] : memref<8x128xf32, #tpu.memory_space<vmem>>, vector<8x128xf32>
    %1 = arith.truncf %0 : vector<8x128xf32> to vector<8x128xbf16>
    %c0_1 = arith.constant 0 : index
    %c0_2 = arith.constant 0 : index
    %2 = vector.load %arg2[%c0_1, %c0_2] : memref<128x128xbf16, #tpu.memory_space<vmem>>, vector<128x128xbf16>
    %cst = arith.constant dense<0.000000e+00> : vector<8x128xf32>
    %3 = tpu.matmul %1, %2, %cst {dimension_numbers = #tpu.dot_dimension_numbers<[1], [0], [0], [1], [0, 0, 1, 1], [], []>} : vector<8x128xbf16>, vector<128x128xbf16>, vector<8x128xf32> -> vector<8x128xf32>
    %c0_3 = arith.constant 0 : index
    %c0_4 = arith.constant 0 : index
    %4 = vector.load %arg3[%c0_3, %c0_4] : memref<1x128xf32, #tpu.memory_space<vmem>>, vector<1x128xf32>
    %5 = vector.broadcast %4 : vector<1x128xf32> to vector<8x128xf32>
    %6 = arith.addf %3, %5 : vector<8x128xf32>
    %cst_5 = arith.constant -3.000000e+01 : f32
    %7 = vector.broadcast %cst_5 : f32 to vector<8x128xf32>
    %8 = arith.maximumf %6, %7 : vector<8x128xf32>
    %cst_6 = arith.constant 0.000000e+00 : f32
    %9 = vector.broadcast %cst_6 : f32 to vector<8x128xf32>
    %10 = arith.subf %9, %8 : vector<8x128xf32>
    %11 = math.exp %10 : vector<8x128xf32>
    %cst_7 = arith.constant 1.000000e+00 : f32
    %12 = vector.broadcast %cst_7 : f32 to vector<8x128xf32>
    %13 = arith.addf %12, %11 : vector<8x128xf32>
    %14 = tpu.reciprocal %13 {approx = true} : vector<8x128xf32> -> vector<8x128xf32>
    %15 = arith.mulf %6, %14 : vector<8x128xf32>
    %16 = arith.truncf %15 : vector<8x128xf32> to vector<8x128xbf16>
    %c0_8 = arith.constant 0 : index
    %c0_9 = arith.constant 0 : index
    %17 = vector.load %arg4[%c0_8, %c0_9] : memref<128x128xbf16, #tpu.memory_space<vmem>>, vector<128x128xbf16>
    %cst_10 = arith.constant dense<0.000000e+00> : vector<8x128xf32>
    %18 = tpu.matmul %16, %17, %cst_10 {dimension_numbers = #tpu.dot_dimension_numbers<[1], [0], [0], [1], [0, 0, 1, 1], [], []>} : vector<8x128xbf16>, vector<128x128xbf16>, vector<8x128xf32> -> vector<8x128xf32>
    %c0_11 = arith.constant 0 : index
    %c0_12 = arith.constant 0 : index
    %19 = vector.load %arg5[%c0_11, %c0_12] : memref<1x128xf32, #tpu.memory_space<vmem>>, vector<1x128xf32>
    %20 = vector.broadcast %19 : vector<1x128xf32> to vector<8x128xf32>
    %21 = arith.addf %18, %20 : vector<8x128xf32>
    %c0_13 = arith.constant 0 : index
    %c0_14 = arith.constant 0 : index
    %22 = vector.load %arg6[%c0_13, %c0_14] : memref<8x128xf32, #tpu.memory_space<vmem>>, vector<8x128xf32>
    tpu.vector_store %arg6[%c0_13, %c0_14], %21 {strides = array<i32>} : memref<8x128xf32, #tpu.memory_space<vmem>>, vector<8x128xf32>,
    return
  }
  func.func @transform_0(%arg0: i32) -> (i32, i32) {
    %c0_i32 = arith.constant 0 : i32
    %c0_i32_0 = arith.constant 0 : i32
    return %arg0, %c0_i32 : i32, i32
  }
  func.func @transform_1(%arg0: i32) -> (i32, i32) {
    %c0_i32 = arith.constant 0 : i32
    %c0_i32_0 = arith.constant 0 : i32
    %c0_i32_1 = arith.constant 0 : i32
    return %c0_i32, %c0_i32_0 : i32, i32
  }
  func.func @transform_2(%arg0: i32) -> (i32, i32) {
    %c0_i32 = arith.constant 0 : i32
    %c0_i32_0 = arith.constant 0 : i32
    %c0_i32_1 = arith.constant 0 : i32
    return %c0_i32, %c0_i32_0 : i32, i32
  }
  func.func @transform_3(%arg0: i32) -> (i32, i32) {
    %c0_i32 = arith.constant 0 : i32
    %c0_i32_0 = arith.constant 0 : i32
    %c0_i32_1 = arith.constant 0 : i32
    return %c0_i32, %c0_i32_0 : i32, i32
  }
  func.func @transform_4(%arg0: i32) -> (i32, i32) {
    %c0_i32 = arith.constant 0 : i32
    %c0_i32_0 = arith.constant 0 : i32
    %c0_i32_1 = arith.constant 0 : i32
    return %c0_i32, %c0_i32_0 : i32, i32
  }
  func.func @transform_5(%arg0: i32) -> (i32, i32) {
    %c0_i32 = arith.constant 0 : i32
    %c0_i32_0 = arith.constant 0 : i32
    return %arg0, %c0_i32 : i32, i32
  }
}

</mosaic_0001>

<llo_original>
// kernel: tpu_custom_call.1
$region0: #{tpu_custom_call.1}
  #allocation0 [shape = 'u32[]', space=smem, size = 0x4, offset = 0x4, fixed_abs, tag = 'smem constant byte address 0x4 - core index']
  #allocation1 [shape = 'u32[144,128]{1,0:T(1,128)}', space=vmem, size = 0x12000, scoped, tag = 'internal scratch']
  %s0 = inlined_call_operand.hbm [shape: f32[8,128], index: 0, kind: input, shape index: {}]
  %s1 = inlined_call_operand.hbm [shape: bf16[128,128], index: 1, kind: input, shape index: {}]
  %s2 = inlined_call_operand.vmem [shape: f32[1,128], index: 2, kind: input, shape index: {}]
  %s3 = inlined_call_operand.hbm [shape: bf16[128,128], index: 3, kind: input, shape index: {}]
  %s4 = inlined_call_operand.vmem [shape: f32[1,128], index: 4, kind: input, shape index: {}]
  %s5 = inlined_call_operand.hbm [shape: f32[8,128], index: 5, kind: output, shape index: {}]
  %s6 = sld [smem:[#allocation0]]
  $region42: #{tpu_custom_call.1} parent=0
    _
  %s8 = ssub.s32 1, %s6
  %s9 = scalar_select 0, %s8, %s6
  $region1: #{tpu_custom_call.1} parent=0
    #allocation2 [shape = 'u8[4096]{0}', space=vmem, size = 0x1000, scoped, tag = 'input window, operand 0, single buffered']
    #allocation3 [shape = 's32[1]{0}', space=sflag, size = 0x4, scoped, tag = 'scoped memory for tpu_custom_call.1']
    #allocation4 [shape = 's32[1]{0}', space=sflag, size = 0x4, scoped, tag = 'scoped memory for tpu_custom_call.1']
    #allocation5 [shape = 'u8[32768]{0}', space=vmem, size = 0x8000, scoped, tag = 'input window, operand 1, single buffered']
    #allocation6 [shape = 's32[1]{0}', space=sflag, size = 0x4, scoped, tag = 'scoped memory for tpu_custom_call.1']
    #allocation7 [shape = 'u8[32768]{0}', space=vmem, size = 0x8000, scoped, tag = 'input window, operand 3, single buffered']
    #allocation8 [shape = 'u8[4096]{0}', space=vmem, size = 0x1000, scoped, tag = 'output window, operand 0, single buffered']
    %10 = vsyncpa [#allocation3], 0
    %11 = vsyncpa [#allocation6], 0
    %12 = vsyncpa [#allocation4], 0
    // Predicated region
    $region2: #{tpu_custom_call.1} parent=1 // pred_check
      _
    $region3: #{tpu_custom_call.1} parent=1 // pred_check_branch
      %14 = sbr.rel (0) target = $region5
    $region4: #{tpu_custom_call.1} parent=1 // pred_region
      %s16 = ssub.s32 128, 128
      %17 = vsyncadd [#allocation3], %s16
      %s19 = sshll.u32 [#allocation2], 4
      %s20 = int_to_ptr.vmem [resolvable:$true] %s19
      %22 = dma.hbm_to_vmem [thread:$0]  %s0, 128, %s20, [#allocation3]
    $region5: #{tpu_custom_call.1} parent=1 // pred_fallthru
      _
    // Predicated region
    $region6: #{tpu_custom_call.1} parent=1 // pred_check
      _
    $region7: #{tpu_custom_call.1} parent=1 // pred_check_branch
      %24 = sbr.rel (0) target = $region9
    $region8: #{tpu_custom_call.1} parent=1 // pred_region
      %s26 = ssub.s32 1024, 1024
      %27 = vsyncadd [#allocation6], %s26
      %s28 = sshll.u32 [#allocation5], 4
      %s29 = int_to_ptr.vmem [resolvable:$true] %s28
      %34 = dma.hbm_to_vmem [thread:$0]  %s1, 1024, %s29, [#allocation6], 64, 64, 4
    $region9: #{tpu_custom_call.1} parent=1 // pred_fallthru
      _
    // Predicated region
    $region10: #{tpu_custom_call.1} parent=1 // pred_check
      _
    $region11: #{tpu_custom_call.1} parent=1 // pred_check_branch
      %36 = sbr.rel (0) target = $region13
    $region12: #{tpu_custom_call.1} parent=1 // pred_region
      _
    $region13: #{tpu_custom_call.1} parent=1 // pred_fallthru
      _
    // Predicated region
    $region14: #{tpu_custom_call.1} parent=1 // pred_check
      _
    $region15: #{tpu_custom_call.1} parent=1 // pred_check_branch
      %38 = sbr.rel (0) target = $region17
    $region16: #{tpu_custom_call.1} parent=1 // pred_region
      %s40 = ssub.s32 1024, 1024
      %41 = vsyncadd [#allocation6], %s40
      %s42 = sshll.u32 [#allocation7], 4
      %s43 = int_to_ptr.vmem [resolvable:$true] %s42
      %48 = dma.hbm_to_vmem [thread:$0]  %s3, 1024, %s43, [#allocation6], 64, 64, 4
    $region17: #{tpu_custom_call.1} parent=1 // pred_fallthru
      _
    // Predicated region
    $region18: #{tpu_custom_call.1} parent=1 // pred_check
      _
    $region19: #{tpu_custom_call.1} parent=1 // pred_check_branch
      %50 = sbr.rel (0) target = $region21
    $region20: #{tpu_custom_call.1} parent=1 // pred_region
      _
    $region21: #{tpu_custom_call.1} parent=1 // pred_fallthru
      _
    // Predicated region
    $region22: #{tpu_custom_call.1} parent=1 // pred_check
      _
    $region23: #{tpu_custom_call.1} parent=1 // pred_check_branch
      %52 = sbr.rel (0) target = $region25
    $region24: #{tpu_custom_call.1} parent=1 // pred_region
      %53 = dma.done [#allocation3], 128
    $region25: #{tpu_custom_call.1} parent=1 // pred_fallthru
      _
    // Predicated region
    $region26: #{tpu_custom_call.1} parent=1 // pred_check
      _
    $region27: #{tpu_custom_call.1} parent=1 // pred_check_branch
      %55 = sbr.rel (0) target = $region29
    $region28: #{tpu_custom_call.1} parent=1 // pred_region
      %56 = dma.done [#allocation6], 1024
    $region29: #{tpu_custom_call.1} parent=1 // pred_fallthru
      _
    // Predicated region
    $region30: #{tpu_custom_call.1} parent=1 // pred_check
      _
    $region31: #{tpu_custom_call.1} parent=1 // pred_check_branch
      %58 = sbr.rel (0) target = $region33
    $region32: #{tpu_custom_call.1} parent=1 // pred_region
      %59 = dma.done [#allocation6], 1024
    $region33: #{tpu_custom_call.1} parent=1 // pred_fallthru
      _
    %v61 = vld [vmem:[#allocation2] sm:$0xff]
    %v62 = vpack.c.bf16 %v61, %v61
    %v63 = vld [vmem:[#allocation5] sm:$0xf]
    %v64 = vld [vmem:[#allocation5 + $0x4] sm:$0xf]
    %v65 = vld [vmem:[#allocation5 + $0x8] sm:$0xf]
    %v66 = vld [vmem:[#allocation5 + $0xc] sm:$0xf]
    %v67 = vld [vmem:[#allocation5 + $0x10] sm:$0xf]
    %v68 = vld [vmem:[#allocation5 + $0x14] sm:$0xf]
    %v69 = vld [vmem:[#allocation5 + $0x18] sm:$0xf]
    %v70 = vld [vmem:[#allocation5 + $0x1c] sm:$0xf]
    %v71 = vld [vmem:[#allocation5 + $0x20] sm:$0xf]
    %v72 = vld [vmem:[#allocation5 + $0x24] sm:$0xf]
    %v73 = vld [vmem:[#allocation5 + $0x28] sm:$0xf]
    %v74 = vld [vmem:[#allocation5 + $0x2c] sm:$0xf]
    %v75 = vld [vmem:[#allocation5 + $0x30] sm:$0xf]
    %v76 = vld [vmem:[#allocation5 + $0x34] sm:$0xf]
    %v77 = vld [vmem:[#allocation5 + $0x38] sm:$0xf]
    %v78 = vld [vmem:[#allocation5 + $0x3c] sm:$0xf]
    %v79 = vld [vmem:[%s2] sm:$0x1]
    %v81 = vlaneseq
    %v82 = vshrl.u32 %v81, 7
    %v83 = vsub.s32 0, %v82
    %v84 = vrot.slane %v79, %v83
    %v102 = vunpack.c.l.b16 %v63
    %v103 = vunpack.c.l.b16 %v64
    %v104 = vunpack.c.l.b16 %v65
    %v105 = vunpack.c.l.b16 %v66
    %v106 = vunpack.c.l.b16 %v67
    %v107 = vunpack.c.l.b16 %v68
    %v108 = vunpack.c.l.b16 %v69
    %v109 = vunpack.c.l.b16 %v70
    %v110 = vunpack.c.l.b16 %v71
    %v111 = vunpack.c.l.b16 %v72
    %v112 = vunpack.c.l.b16 %v73
    %v113 = vunpack.c.l.b16 %v74
    %v114 = vunpack.c.l.b16 %v75
    %v115 = vunpack.c.l.b16 %v76
    %v116 = vunpack.c.l.b16 %v77
    %v117 = vunpack.c.l.b16 %v78
    %v118 = vpack.c.b16 %v103, %v102
    %v119 = vpack.c.b16 %v105, %v104
    %v120 = vpack.c.b16 %v107, %v106
    %v121 = vpack.c.b16 %v109, %v108
    %v122 = vpack.c.b16 %v111, %v110
    %v123 = vpack.c.b16 %v113, %v112
    %v124 = vpack.c.b16 %v115, %v114
    %v125 = vpack.c.b16 %v117, %v116
    %134 = vmatprep.subr.bf16.mxu0 0
    %135 = vmatpush1.bf16.msra.mxu0 %v125
    %136 = vmatprep.subr.bf16.mxu0 0
    %137 = vmatpush1.bf16.msra.mxu0 %v124
    %138 = vmatprep.subr.bf16.mxu0 0
    %139 = vmatpush1.bf16.msra.mxu0 %v123
    %140 = vmatprep.subr.bf16.mxu0 0
    %141 = vmatpush1.bf16.msra.mxu0 %v122
    %142 = vmatprep.subr.bf16.mxu0 0
    %143 = vmatpush1.bf16.msra.mxu0 %v121
    %144 = vmatprep.subr.bf16.mxu0 0
    %145 = vmatpush1.bf16.msra.mxu0 %v120
    %146 = vmatprep.subr.bf16.mxu0 0
    %147 = vmatpush1.bf16.msra.mxu0 %v119
    %148 = vmatprep.subr.bf16.mxu0 0
    %149 = vmatpush1.bf16.msra.mxu0 %v118
    %150 = vmatprep.subr.bf16.mxu0 0
    %151 = vmatpush2.bf16.msra.mxu0 0
    %152 = vmatprep.subr.bf16.mxu0 0
    %153 = vmatpush2.bf16.msra.mxu0 0
    %154 = vmatprep.subr.bf16.mxu0 0
    %155 = vmatpush2.bf16.msra.mxu0 0
    %156 = vmatprep.subr.bf16.mxu0 0
    %157 = vmatpush2.bf16.msra.mxu0 0
    %158 = vmatprep.subr.bf16.mxu0 0
    %159 = vmatpush2.bf16.msra.mxu0 0
    %160 = vmatprep.subr.bf16.mxu0 0
    %161 = vmatpush2.bf16.msra.mxu0 0
    %162 = vmatprep.subr.bf16.mxu0 0
    %163 = vmatpush2.bf16.msra.mxu0 0
    %164 = vmatprep.subr.bf16.mxu0 0
    %165 = vmatpush2.bf16.msra.mxu0 0
    %166 = vmatprep.mubr.bf16.mxu0 0
    %167 = vmatmul.mubr.bf16.gmra.mxu0 %v62
    %v168 = vpop.f32.mrf.mxu0
    %v169 = vadd.f32 %v84, %v168
    %v170 = vpop.f32.mrf.mxu0
    %v171 = vpop.f32.mrf.mxu0
    %v172 = vpop.f32.mrf.mxu0
    %173 = vdwg.mxu0
    %v174 = vmax.f32 %v169, -30.0
    %v175 = vsub.f32 0.0, %v174
    %v176 = vmul.f32 %v175, 1.442695
    %v177 = vpow.pop %v176
    %v178 = vadd.f32 %v177, 1.0
    %v179 = vrcp.pop %v178
    %v180 = vmul.f32 %v169, %v179
    %v181 = vpack.c.bf16 %v180, %v180
    %v182 = vld [vmem:[#allocation7] sm:$0xf]
    %v183 = vld [vmem:[#allocation7 + $0x4] sm:$0xf]
    %v184 = vld [vmem:[#allocation7 + $0x8] sm:$0xf]
    %v185 = vld [vmem:[#allocation7 + $0xc] sm:$0xf]
    %v186 = vld [vmem:[#allocation7 + $0x10] sm:$0xf]
    %v187 = vld [vmem:[#allocation7 + $0x14] sm:$0xf]
    %v188 = vld [vmem:[#allocation7 + $0x18] sm:$0xf]
    %v189 = vld [vmem:[#allocation7 + $0x1c] sm:$0xf]
    %v190 = vld [vmem:[#allocation7 + $0x20] sm:$0xf]
    %v191 = vld [vmem:[#allocation7 + $0x24] sm:$0xf]
    %v192 = vld [vmem:[#allocation7 + $0x28] sm:$0xf]
    %v193 = vld [vmem:[#allocation7 + $0x2c] sm:$0xf]
    %v194 = vld [vmem:[#allocation7 + $0x30] sm:$0xf]
    %v195 = vld [vmem:[#allocation7 + $0x34] sm:$0xf]
    %v196 = vld [vmem:[#allocation7 + $0x38] sm:$0xf]
    %v197 = vld [vmem:[#allocation7 + $0x3c] sm:$0xf]
    %v198 = vld [vmem:[%s4] sm:$0x1]
    %v200 = vlaneseq
    %v201 = vshrl.u32 %v200, 7
    %v202 = vsub.s32 0, %v201
    %v203 = vrot.slane %v198, %v202
    %v221 = vunpack.c.l.b16 %v182
    %v222 = vunpack.c.l.b16 %v183
    %v223 = vunpack.c.l.b16 %v184
    %v224 = vunpack.c.l.b16 %v185
    %v225 = vunpack.c.l.b16 %v186
    %v226 = vunpack.c.l.b16 %v187
    %v227 = vunpack.c.l.b16 %v188
    %v228 = vunpack.c.l.b16 %v189
    %v229 = vunpack.c.l.b16 %v190
    %v230 = vunpack.c.l.b16 %v191
    %v231 = vunpack.c.l.b16 %v192
    %v232 = vunpack.c.l.b16 %v193
    %v233 = vunpack.c.l.b16 %v194
    %v234 = vunpack.c.l.b16 %v195
    %v235 = vunpack.c.l.b16 %v196
    %v236 = vunpack.c.l.b16 %v197
    %v237 = vpack.c.b16 %v222, %v221
    %v238 = vpack.c.b16 %v224, %v223
    %v239 = vpack.c.b16 %v226, %v225
    %v240 = vpack.c.b16 %v228, %v227
    %v241 = vpack.c.b16 %v230, %v229
    %v242 = vpack.c.b16 %v232, %v231
    %v243 = vpack.c.b16 %v234, %v233
    %v244 = vpack.c.b16 %v236, %v235
    %253 = vmatprep.subr.bf16.mxu0 0
    %254 = vmatpush1.bf16.msra.mxu0 %v244
    %255 = vmatprep.subr.bf16.mxu0 0
    %256 = vmatpush1.bf16.msra.mxu0 %v243
    %257 = vmatprep.subr.bf16.mxu0 0
    %258 = vmatpush1.bf16.msra.mxu0 %v242
    %259 = vmatprep.subr.bf16.mxu0 0
    %260 = vmatpush1.bf16.msra.mxu0 %v241
    %261 = vmatprep.subr.bf16.mxu0 0
    %262 = vmatpush1.bf16.msra.mxu0 %v240
    %263 = vmatprep.subr.bf16.mxu0 0
    %264 = vmatpush1.bf16.msra.mxu0 %v239
    %265 = vmatprep.subr.bf16.mxu0 0
    %266 = vmatpush1.bf16.msra.mxu0 %v238
    %267 = vmatprep.subr.bf16.mxu0 0
    %268 = vmatpush1.bf16.msra.mxu0 %v237
    %269 = vmatprep.subr.bf16.mxu0 0
    %270 = vmatpush2.bf16.msra.mxu0 0
    %271 = vmatprep.subr.bf16.mxu0 0
    %272 = vmatpush2.bf16.msra.mxu0 0
    %273 = vmatprep.subr.bf16.mxu0 0
    %274 = vmatpush2.bf16.msra.mxu0 0
    %275 = vmatprep.subr.bf16.mxu0 0
    %276 = vmatpush2.bf16.msra.mxu0 0
    %277 = vmatprep.subr.bf16.mxu0 0
    %278 = vmatpush2.bf16.msra.mxu0 0
    %279 = vmatprep.subr.bf16.mxu0 0
    %280 = vmatpush2.bf16.msra.mxu0 0
    %281 = vmatprep.subr.bf16.mxu0 0
    %282 = vmatpush2.bf16.msra.mxu0 0
    %283 = vmatprep.subr.bf16.mxu0 0
    %284 = vmatpush2.bf16.msra.mxu0 0
    %285 = vmatprep.mubr.bf16.mxu0 0
    %286 = vmatmul.mubr.bf16.gmra.mxu0 %v181
    %v287 = vpop.f32.mrf.mxu0
    %v288 = vadd.f32 %v203, %v287
    %v289 = vpop.f32.mrf.mxu0
    %v290 = vpop.f32.mrf.mxu0
    %v291 = vpop.f32.mrf.mxu0
    %292 = vdwg.mxu0
    %293 = vst [vmem:[#allocation8] sm:$0xff] %v288
    // Predicated region
    $region34: #{tpu_custom_call.1} parent=1 // pred_check
      _
    $region35: #{tpu_custom_call.1} parent=1 // pred_check_branch
      %295 = sbr.rel (0) target = $region37
    $region36: #{tpu_custom_call.1} parent=1 // pred_region
      %s297 = ssub.s32 128, 128
      %298 = vsyncadd [#allocation4], %s297
      %s300 = sshll.u32 [#allocation8], 4
      %s301 = int_to_ptr.vmem [resolvable:$true] %s300
      %303 = dma.vmem_to_hbm [thread:$0]  %s301, 128, %s5, [#allocation4]
    $region37: #{tpu_custom_call.1} parent=1 // pred_fallthru
      _
    // Predicated region
    $region38: #{tpu_custom_call.1} parent=1 // pred_check
      _
    $region39: #{tpu_custom_call.1} parent=1 // pred_check_branch
      %305 = sbr.rel (0) target = $region41
    $region40: #{tpu_custom_call.1} parent=1 // pred_region
      %306 = dma.done [#allocation4], 128
    $region41: #{tpu_custom_call.1} parent=1 // pred_fallthru
      _
    %307 = vsyncpa [#allocation3], 1
    %308 = vsyncpa [#allocation6], 1
    %309 = vsyncpa [#allocation4], 1

</llo_original>
